<compile_context>
chip_gen: v7x
topology: tpu7x:2x2x1
jax: 0.10.0
libtpu: 0.0.40
codegen_flags: <defaults>
</compile_context>

<pallas_src>
import jax
import jax.numpy as jnp
from jax import lax
from jax.experimental import pallas as pl
from jax.experimental.pallas import tpu as pltpu


def _round_up(x: int, m: int) -> int:
    return ((x + m - 1) // m) * m


def _cdiv(a: int, b: int) -> int:
    return (a + b - 1) // b


_R_SUB_DEFAULT = 16   # rows per in-kernel sub-block (2 f32 sublane groups / 1 bf16 group)
_CHUNK = 512          # output lanes per in-kernel sub-block (multiple of 128)


def _make_fir_kernel(M: int, R_SUB: int, CHUNK: int):
    def kernel(x_ref, w_ref, o_ref):
        # x_ref: (R, W) full width, w_ref: (R, M), o_ref: (R, W_out) full width.
        R = x_ref.shape[0]
        W_out = o_ref.shape[1]

        n_full_chunks = W_out // CHUNK
        w_tail = W_out - n_full_chunks * CHUNK
        n_full_rows = R // R_SUB
        r_tail = R - n_full_rows * R_SUB

        def row_sweep(r0, rsz):
            # Per-row taps for this sub-block; column slices hoisted out of the
            # width-chunk loop so they are not re-built every chunk iteration.
            wv = w_ref[pl.ds(r0, rsz), :].astype(jnp.float32)          # (rsz, M)
            wcols = [wv[:, m:m + 1] for m in range(M)]

            def mac(c0, cur):
                # Load the (rsz, cur+M-1) window ONCE; run all M taps on the
                # vreg-resident value (shift-MAC on the VPU); store the chunk once.
                win = cur + M - 1
                xw = x_ref[pl.ds(r0, rsz), pl.ds(c0, win)].astype(jnp.float32)
                acc = xw[:, 0:cur] * wcols[0]
                for m in range(1, M):
                    acc = acc + xw[:, m:m + cur] * wcols[m]
                o_ref[pl.ds(r0, rsz), pl.ds(c0, cur)] = acc.astype(o_ref.dtype)

            if n_full_chunks > 0:
                def chunk_body(c, carry):
                    mac(pl.multiple_of(c * CHUNK, CHUNK), CHUNK)
                    return carry
                lax.fori_loop(0, n_full_chunks, chunk_body, 0)
            if w_tail > 0:
                # Static tail chunk: masked vst only on the last partial lane group.
                mac(n_full_chunks * CHUNK, w_tail)

        if n_full_rows > 0:
            def row_body(j, carry):
                row_sweep(pl.multiple_of(j * R_SUB, R_SUB), R_SUB)
                return carry
            lax.fori_loop(0, n_full_rows, row_body, 0)
        if r_tail > 0:
            row_sweep(n_full_rows * R_SUB, r_tail)

    return kernel


def _device_profile():
    """(per-core VMEM bytes, TensorCores per device) for the local TPU generation."""
    kind = ""
    try:
        kind = jax.devices()[0].device_kind.lower()
    except Exception:
        pass
    if "v7" in kind:
        return 64 * 2**20, 2            # v7x: 64 MiB VMEM per TC, 2 TCs per chip
    if ("v5 lite" in kind) or ("v5e" in kind) or ("v6" in kind):
        return 128 * 2**20, 1           # v5e / v6e: 128 MiB, single TC
    return 64 * 2**20, 1                # unknown: conservative


def fir_cnn_forward(x, fir_weights):
    """x: (B, C, 1, W) with C = P*2;  fir_weights: (C, 1, 1, M).  Returns (B, C, 1, W-M+1)."""
    B, C, H, W = x.shape
    assert H == 1, "FIRCNNModule expects height == 1"
    Cw, _, _, M = fir_weights.shape
    assert Cw == C, "weight channel count must match input channels (P*2)"
    W_out = W - M + 1
    assert W_out >= 1, "input width must be >= number of taps M"

    rows = B * C
    x2 = x.reshape(rows, W)                                # metadata-only reshape, no pad
    w2 = jnp.tile(fir_weights.reshape(C, M), (B, 1))       # (rows, M): tiny per-row taps

    itemsize = jnp.dtype(x.dtype).itemsize
    sub = max(8, 32 // max(itemsize, 1))                   # 8 f32 / 16 bf16 / 32 int8

    vmem_cap, n_cores = _device_profile()
    vmem_limit = int(vmem_cap * 0.78)                      # leave headroom for Mosaic scratch

    # Per-grid-step tile bytes (input + output + weights); the pipeline double-buffers.
    bytes_per_row = W * itemsize + W_out * itemsize + M * jnp.dtype(w2.dtype).itemsize
    tile_budget = int(vmem_limit * 0.6) // 2
    cap_rows = max(sub, (tile_budget // max(bytes_per_row, 1)) // sub * sub)
    # TODO(synk): for W so large that even `sub` rows exceed VMEM, add a width grid
    # axis with halo'd input blocks; not needed for realistic FIR tap/width sizes.

    if rows % sub != 0:
        row_tile = rows                                    # full-dim block (exempt), no pad
    else:
        limit = min(cap_rows, rows)
        if n_cores > 1:
            # Aim for >=4 grid steps per TensorCore while keeping each step >= ~1 MiB.
            per_step_min = max(sub, _round_up(_cdiv(1 << 20, bytes_per_row), sub))
            target = max(per_step_min, _round_up(_cdiv(rows, 4 * n_cores), sub))
            limit = max(sub, min(limit, target))
        # Largest multiple-of-`sub` divisor of rows that is <= limit (no row padding).
        row_tile = sub
        t = max(1, limit // sub)
        while t >= 1:
            if rows % (t * sub) == 0:
                row_tile = t * sub
                break
            t -= 1

    grid = (rows // row_tile,)
    r_sub = max(_R_SUB_DEFAULT, sub)
    kernel = _make_fir_kernel(M, r_sub, _CHUNK)

    cost = pl.CostEstimate(
        flops=2 * rows * W_out * M,
        transcendentals=0,
        bytes_accessed=(x2.size * x2.dtype.itemsize
                        + w2.size * w2.dtype.itemsize
                        + rows * W_out * x.dtype.itemsize),
    )

    out2 = pl.pallas_call(
        kernel,
        out_shape=jax.ShapeDtypeStruct((rows, W_out), x.dtype),
        grid_spec=pltpu.PrefetchScalarGridSpec(
            num_scalar_prefetch=0,
            grid=grid,
            in_specs=[
                pl.BlockSpec((row_tile, W), lambda r: (r, 0)),      # full width (exempt)
                pl.BlockSpec((row_tile, M), lambda r: (r, 0)),      # full taps  (exempt)
            ],
            out_specs=pl.BlockSpec((row_tile, W_out), lambda r: (r, 0)),
        ),
        compiler_params=pltpu.CompilerParams(
            dimension_semantics=("parallel",),
            vmem_limit_bytes=vmem_limit,
        ),
        cost_estimate=cost,
    )(x2, w2)

    # Metadata-only reshape back to NCHW; no pad was added, so nothing to slice off.
    return out2.reshape(B, C, 1, W_out)


def _reference(x, fir_weights):
    """Pure-JAX reference of the depthwise valid conv along width."""
    B, C, _, W = x.shape
    M = fir_weights.shape[-1]
    W_out = W - M + 1
    w = fir_weights.reshape(C, M)
    out = jnp.zeros((B, C, W_out), jnp.float32)
    for m in range(M):
        out = out + x[:, :, 0, m:m + W_out].astype(jnp.float32) * w[None, :, m:m + 1]
    return out.reshape(B, C, 1, W_out).astype(x.dtype)


if __name__ == "__main__":
    key = jax.random.PRNGKey(0)
    k1, k2, k3, k4, k5, k6 = jax.random.split(key, 6)

    # Test 1: shapes implied by the module docstring (input width == M, W_out == 1).
    P, M, B = 4, 8, 2
    C = P * 2
    x = jax.random.normal(k1, (B, C, 1, M), dtype=jnp.float32)
    w = jax.random.normal(k2, (C, 1, 1, M), dtype=jnp.float32)
    out = jax.block_until_ready(fir_cnn_forward(x, w))
    assert out.shape == (B, C, 1, 1), out.shape
    assert jnp.allclose(out, _reference(x, w), atol=1e-5, rtol=1e-5), "mismatch (W == M)"

    # Test 2: wider input, W_out < CHUNK (tail-only chunk path, masked tail store).
    P2, M2, B2, W2 = 4, 7, 2, 500
    C2 = P2 * 2
    x2 = jax.random.normal(k3, (B2, C2, 1, W2), dtype=jnp.float32)
    w2 = jax.random.normal(k4, (C2, 1, 1, M2), dtype=jnp.float32)
    out2 = jax.block_until_ready(fir_cnn_forward(x2, w2))
    assert out2.shape == (B2, C2, 1, W2 - M2 + 1), out2.shape
    assert jnp.allclose(out2, _reference(x2, w2), atol=1e-4, rtol=1e-4), "mismatch (W >> M)"

    # Test 3: exercises the full-chunk fori_loop + width tail + row sub-block loop + row tail.
    P3, M3, B3, W3 = 4, 5, 5, 700
    C3 = P3 * 2
    x3 = jax.random.normal(k5, (B3, C3, 1, W3), dtype=jnp.float32)
    w3 = jax.random.normal(k6, (C3, 1, 1, M3), dtype=jnp.float32)
    out3 = jax.block_until_ready(fir_cnn_forward(x3, w3))
    assert out3.shape == (B3, C3, 1, W3 - M3 + 1), out3.shape
    assert jnp.allclose(out3, _reference(x3, w3), atol=1e-4, rtol=1e-4), "mismatch (chunked)"

    print("KERNEL_OK")
</pallas_src>

<mosaic_0001>
module attributes {stable_mosaic.version = 11 : i64} {
  func.func @kernel(%arg0: i32, %arg1: memref<16x8xf32, #tpu.memory_space<vmem>>, %arg2: memref<16x8xf32, #tpu.memory_space<vmem>>, %arg3: memref<16x1xf32, #tpu.memory_space<vmem>>) attributes {dimension_semantics = [#tpu.dimension_semantics<parallel>], iteration_bounds = array<i64: 1>, scalar_prefetch = 0 : i64, scratch_operands = 0 : i64, tpu.core_type = #tpu.core_type<tc>, window_params = [{transform_indices = @transform_0, window_bounds = array<i64: 16, 8>}, {transform_indices = @transform_1, window_bounds = array<i64: 16, 8>}, {transform_indices = @transform_2, window_bounds = array<i64: 16, 1>}]} {
    %c0_i32 = arith.constant 0 : i32
    %c16_i32 = arith.constant 16 : i32
    %0 = arith.muli %c0_i32, %c16_i32 : i32
    %1 = tpu.assume_multiple %0, 16 : i32
    %2 = arith.index_cast %1 : i32 to index
    %c0 = arith.constant 0 : index
    %3 = vector.load %arg2[%2, %c0] : memref<16x8xf32, #tpu.memory_space<vmem>>, vector<16x8xf32>
    %4 = vector.extract_strided_slice %3 {offsets = [0, 0], sizes = [16, 1], strides = [1, 1]} : vector<16x8xf32> to vector<16x1xf32>
    %5 = vector.extract_strided_slice %3 {offsets = [0, 1], sizes = [16, 1], strides = [1, 1]} : vector<16x8xf32> to vector<16x1xf32>
    %6 = vector.extract_strided_slice %3 {offsets = [0, 2], sizes = [16, 1], strides = [1, 1]} : vector<16x8xf32> to vector<16x1xf32>
    %7 = vector.extract_strided_slice %3 {offsets = [0, 3], sizes = [16, 1], strides = [1, 1]} : vector<16x8xf32> to vector<16x1xf32>
    %8 = vector.extract_strided_slice %3 {offsets = [0, 4], sizes = [16, 1], strides = [1, 1]} : vector<16x8xf32> to vector<16x1xf32>
    %9 = vector.extract_strided_slice %3 {offsets = [0, 5], sizes = [16, 1], strides = [1, 1]} : vector<16x8xf32> to vector<16x1xf32>
    %10 = vector.extract_strided_slice %3 {offsets = [0, 6], sizes = [16, 1], strides = [1, 1]} : vector<16x8xf32> to vector<16x1xf32>
    %11 = vector.extract_strided_slice %3 {offsets = [0, 7], sizes = [16, 1], strides = [1, 1]} : vector<16x8xf32> to vector<16x1xf32>
    %12 = arith.index_cast %1 : i32 to index
    %c0_0 = arith.constant 0 : index
    %13 = vector.load %arg1[%12, %c0_0] : memref<16x8xf32, #tpu.memory_space<vmem>>, vector<16x8xf32>
    %14 = vector.extract_strided_slice %13 {offsets = [0, 0], sizes = [16, 1], strides = [1, 1]} : vector<16x8xf32> to vector<16x1xf32>
    %15 = arith.mulf %14, %4 : vector<16x1xf32>
    %16 = vector.extract_strided_slice %13 {offsets = [0, 1], sizes = [16, 1], strides = [1, 1]} : vector<16x8xf32> to vector<16x1xf32>
    %17 = arith.mulf %16, %5 : vector<16x1xf32>
    %18 = arith.addf %15, %17 : vector<16x1xf32>
    %19 = vector.extract_strided_slice %13 {offsets = [0, 2], sizes = [16, 1], strides = [1, 1]} : vector<16x8xf32> to vector<16x1xf32>
    %20 = arith.mulf %19, %6 : vector<16x1xf32>
    %21 = arith.addf %18, %20 : vector<16x1xf32>
    %22 = vector.extract_strided_slice %13 {offsets = [0, 3], sizes = [16, 1], strides = [1, 1]} : vector<16x8xf32> to vector<16x1xf32>
    %23 = arith.mulf %22, %7 : vector<16x1xf32>
    %24 = arith.addf %21, %23 : vector<16x1xf32>
    %25 = vector.extract_strided_slice %13 {offsets = [0, 4], sizes = [16, 1], strides = [1, 1]} : vector<16x8xf32> to vector<16x1xf32>
    %26 = arith.mulf %25, %8 : vector<16x1xf32>
    %27 = arith.addf %24, %26 : vector<16x1xf32>
    %28 = vector.extract_strided_slice %13 {offsets = [0, 5], sizes = [16, 1], strides = [1, 1]} : vector<16x8xf32> to vector<16x1xf32>
    %29 = arith.mulf %28, %9 : vector<16x1xf32>
    %30 = arith.addf %27, %29 : vector<16x1xf32>
    %31 = vector.extract_strided_slice %13 {offsets = [0, 6], sizes = [16, 1], strides = [1, 1]} : vector<16x8xf32> to vector<16x1xf32>
    %32 = arith.mulf %31, %10 : vector<16x1xf32>
    %33 = arith.addf %30, %32 : vector<16x1xf32>
    %34 = vector.extract_strided_slice %13 {offsets = [0, 7], sizes = [16, 1], strides = [1, 1]} : vector<16x8xf32> to vector<16x1xf32>
    %35 = arith.mulf %34, %11 : vector<16x1xf32>
    %36 = arith.addf %33, %35 : vector<16x1xf32>
    %37 = arith.index_cast %1 : i32 to index
    %c0_1 = arith.constant 0 : index
    %38 = vector.load %arg3[%37, %c0_1] : memref<16x1xf32, #tpu.memory_space<vmem>>, vector<16x1xf32>
    tpu.vector_store %arg3[%37, %c0_1], %36 {strides = array<i32>} : memref<16x1xf32, #tpu.memory_space<vmem>>, vector<16x1xf32>,
    %c1_i32 = arith.constant 1 : i32
    return
  }
  func.func @transform_0(%arg0: i32) -> (i32, i32) {
    %c0_i32 = arith.constant 0 : i32
    %c0_i32_0 = arith.constant 0 : i32
    return %arg0, %c0_i32 : i32, i32
  }
  func.func @transform_1(%arg0: i32) -> (i32, i32) {
    %c0_i32 = arith.constant 0 : i32
    %c0_i32_0 = arith.constant 0 : i32
    return %arg0, %c0_i32 : i32, i32
  }
  func.func @transform_2(%arg0: i32) -> (i32, i32) {
    %c0_i32 = arith.constant 0 : i32
    %c0_i32_0 = arith.constant 0 : i32
    return %arg0, %c0_i32 : i32, i32
  }
}

</mosaic_0001>

<llo_original>
// kernel: tpu_custom_call.1
$region0: #{tpu_custom_call.1}
  #allocation0 [shape = 'u32[]', space=smem, size = 0x4, offset = 0x4, fixed_abs, tag = 'smem constant byte address 0x4 - core index']
  #allocation1 [shape = 'u32[144,128]{1,0:T(1,128)}', space=vmem, size = 0x12000, scoped, tag = 'internal scratch']
  %s0 = inlined_call_operand.vmem [shape: f32[16,8], index: 0, kind: input, shape index: {}]
  %s1 = inlined_call_operand.vmem [shape: f32[16,8], index: 1, kind: input, shape index: {}]
  %s2 = inlined_call_operand.vmem [shape: f32[16,1], index: 2, kind: output, shape index: {}]
  %s3 = sld [smem:[#allocation0]]
  $region18: #{tpu_custom_call.1} parent=0
    _
  %s5 = ssub.s32 1, %s3
  %s6 = scalar_select 0, %s5, %s3
  // Predicated region
  $region2: #{tpu_custom_call.1} parent=0 // pred_check
    _
  $region3: #{tpu_custom_call.1} parent=0 // pred_check_branch
    %8 = sbr.rel (0) target = $region5
  $region4: #{tpu_custom_call.1} parent=0 // pred_region
    _
  $region5: #{tpu_custom_call.1} parent=0 // pred_fallthru
    _
  // Predicated region
  $region6: #{tpu_custom_call.1} parent=0 // pred_check
    _
  $region7: #{tpu_custom_call.1} parent=0 // pred_check_branch
    %10 = sbr.rel (0) target = $region9
  $region8: #{tpu_custom_call.1} parent=0 // pred_region
    _
  $region9: #{tpu_custom_call.1} parent=0 // pred_fallthru
    _
  %v11 = vld [vmem:[%s1] sm:$0xff]
  %v12 = vld [vmem:[%s1 + $0x8] sm:$0xff]
  %v13 = vld [vmem:[%s0] sm:$0xff]
  %v14 = vld [vmem:[%s0 + $0x8] sm:$0xff]
  %v15 = vmul.f32 %v13, %v11
  %v16 = vmul.f32 %v14, %v12
  %19 = vrot.lane.b32.xlu0 %v15, 127
  %v20 = vpop.permute.xlu0 %19
  %21 = vrot.lane.b32.xlu0 %v16, 127
  %v22 = vpop.permute.xlu0 %21
  %v25 = vadd.f32 %v15, %v20
  %v26 = vadd.f32 %v16, %v22
  %27 = vrot.lane.b32.xlu0 %v15, 126
  %v28 = vpop.permute.xlu0 %27
  %29 = vrot.lane.b32.xlu0 %v16, 126
  %v30 = vpop.permute.xlu0 %29
  %v33 = vadd.f32 %v25, %v28
  %v34 = vadd.f32 %v26, %v30
  %35 = vrot.lane.b32.xlu0 %v15, 125
  %v36 = vpop.permute.xlu0 %35
  %37 = vrot.lane.b32.xlu0 %v16, 125
  %v38 = vpop.permute.xlu0 %37
  %v41 = vadd.f32 %v33, %v36
  %v42 = vadd.f32 %v34, %v38
  %43 = vrot.lane.b32.xlu0 %v15, 124
  %v44 = vpop.permute.xlu0 %43
  %45 = vrot.lane.b32.xlu0 %v16, 124
  %v46 = vpop.permute.xlu0 %45
  %v49 = vadd.f32 %v41, %v44
  %v50 = vadd.f32 %v42, %v46
  %51 = vrot.lane.b32.xlu0 %v15, 123
  %v52 = vpop.permute.xlu0 %51
  %53 = vrot.lane.b32.xlu0 %v16, 123
  %v54 = vpop.permute.xlu0 %53
  %v57 = vadd.f32 %v49, %v52
  %v58 = vadd.f32 %v50, %v54
  %59 = vrot.lane.b32.xlu0 %v15, 122
  %v60 = vpop.permute.xlu0 %59
  %61 = vrot.lane.b32.xlu0 %v16, 122
  %v62 = vpop.permute.xlu0 %61
  %v65 = vadd.f32 %v57, %v60
  %v66 = vadd.f32 %v58, %v62
  %67 = vrot.lane.b32.xlu0 %v15, 121
  %v68 = vpop.permute.xlu0 %67
  %69 = vrot.lane.b32.xlu0 %v16, 121
  %v70 = vpop.permute.xlu0 %69
  %v73 = vadd.f32 %v65, %v68
  %v74 = vadd.f32 %v66, %v70
  %vm75 = vcmask 7168
  %76 = vst.msk [vmem:[%s2] sm:$0xff] %vm75, %v73
  %77 = vst.msk [vmem:[%s2 + $0x8] sm:$0xff] %vm75, %v74
  // Predicated region
  $region10: #{tpu_custom_call.1} parent=0 // pred_check
    _
  $region11: #{tpu_custom_call.1} parent=0 // pred_check_branch
    %79 = sbr.rel (0) target = $region13
  $region12: #{tpu_custom_call.1} parent=0 // pred_region
    _
  $region13: #{tpu_custom_call.1} parent=0 // pred_fallthru
    _
  // Predicated region
  $region14: #{tpu_custom_call.1} parent=0 // pred_check
    _
  $region15: #{tpu_custom_call.1} parent=0 // pred_check_branch
    %81 = sbr.rel (0) target = $region17
  $region16: #{tpu_custom_call.1} parent=0 // pred_region
    _
  $region17: #{tpu_custom_call.1} parent=0 // pred_fallthru
    _

</llo_original>
